<compile_context>
chip_gen: v5e
topology: v5e:2x2
jax: 0.10.0
libtpu: 0.0.40
codegen_flags: <defaults>
</compile_context>

<pallas_src>
import jax
import jax.numpy as jnp
from jax.experimental import pallas as pl
from jax.experimental.pallas import tpu as pltpu


LANE = 128  # lane width; feature dims padded to this


def _round_up(x, m):
    return ((x + m - 1) // m) * m


def _pad2(a, rows, cols):
    return jnp.pad(a, ((0, rows - a.shape[0]), (0, cols - a.shape[1])))


def _batch_tile(B):
    """Rows per batch tile. Small B -> one tile; large B -> 256-512 row tiles
    with at least 2 grid steps (so v7x can shard the parallel axis on 2 TCs)."""
    Bp8 = _round_up(B, 8)
    if Bp8 <= 256:
        return Bp8
    return min(512, _round_up((Bp8 + 1) // 2, 8))


def _critic_kernel(x_ref, w1_ref, b1_ref, w2_ref, b2_ref, w3_ref, b3_ref, q_ref):
    """Fused 3-layer MLP forward on one batch tile.

    x_ref : (TB, INp)        w1_ref: (INp, Hp)   b1_ref: (1, Hp)
    w2_ref: (Hp, Hp)         b2_ref: (1, Hp)
    w3_ref: (8, Hp)  (row 0 = w3, rows 1-7 zero)   b3_ref: SMEM (1, 1)
    q_ref : (1, 1, TB)  lane-dense output row for this tile
    """
    # fc1 + ReLU  (MXU, f32 accumulate; cast to weight dtype for bf16 path)
    x = x_ref[...].astype(w1_ref.dtype)
    h1 = jnp.dot(x, w1_ref[...], preferred_element_type=jnp.float32) + b1_ref[...]
    h1 = jnp.maximum(h1, 0.0)

    # fc2 + ReLU
    h2 = jnp.dot(h1.astype(w2_ref.dtype), w2_ref[...],
                 preferred_element_type=jnp.float32) + b2_ref[...]
    h2 = jnp.maximum(h2, 0.0)

    # fc3 on the MXU with transposed RHS: (8, Hp) x (TB, Hp)^T -> (8, TB).
    # Row 0 holds q for every batch row of this tile, already lane-dense.
    q8 = jax.lax.dot_general(
        w3_ref[...], h2,
        dimension_numbers=(((1,), (1,)), ((), ())),
        preferred_element_type=jnp.float32,
    )
    q_row = q8[0:1, :] + b3_ref[0, 0]          # (1, TB)
    q_ref[...] = q_row[None].astype(q_ref.dtype)   # (1, 1, TB), full-width store


def prepare_critic_params(w1, b1, w2, b2, w3, b3, dtype=jnp.float32):
    """Pad params to lane-aligned shapes ONCE (outside jit / per-call path).

    Weights are stored (in_features, out_features) so the kernel computes
    y = x @ W + b.  Pass dtype=jnp.bfloat16 for MXU-native inputs on v6e/v7x
    (relax the numeric tolerance accordingly).
    """
    IN, H = w1.shape
    INp, Hp = _round_up(IN, LANE), _round_up(H, LANE)
    w1p = _pad2(w1, INp, Hp).astype(dtype)
    b1p = _pad2(b1.reshape(1, -1), 1, Hp).astype(jnp.float32)
    w2p = _pad2(w2, Hp, Hp).astype(dtype)
    b2p = _pad2(b2.reshape(1, -1), 1, Hp).astype(jnp.float32)
    w3p = _pad2(w3.reshape(1, -1), 8, Hp).astype(jnp.float32)  # (8, Hp), rows 1-7 zero
    b3s = jnp.asarray(b3, jnp.float32).reshape(1, 1)           # scalar -> SMEM
    return w1p, b1p, w2p, b2p, w3p, b3s


@jax.jit
def critic_forward(x, w1p, b1p, w2p, b2p, w3p, b3s):
    """x: (B, IN); remaining args are the pre-padded params from
    prepare_critic_params.  Returns q of shape (B, 1)."""
    B, IN = x.shape
    INp = w1p.shape[0]
    Hp = w1p.shape[1]
    assert INp == _round_up(IN, LANE), "params were padded for a different input size"

    TB = _batch_tile(B)
    Bp = _round_up(B, TB)
    n_tiles = Bp // TB

    xp = _pad2(x, Bp, INp)   # only per-call padding left is on x

    # Weights/biases: constant block index -> stay resident in VMEM across grid.
    def resident(shape):
        return pl.BlockSpec(shape, lambda i: tuple(0 for _ in shape))

    # Raise the scoped-VMEM limit only if the working set needs it.
    itemsize = jnp.dtype(w1p.dtype).itemsize
    weight_bytes = (INp * Hp + Hp * Hp + 8 * Hp) * itemsize + 2 * Hp * 4
    act_bytes = TB * (INp + 2 * Hp) * 4 + TB * 4
    est_vmem = 2 * weight_bytes + 2 * act_bytes     # worst case: everything 2-buffered
    vmem_limit = None
    if est_vmem > 32 * 1024 * 1024:
        vmem_limit = min(int(est_vmem * 1.25), 100 * 1024 * 1024)

    out = pl.pallas_call(
        _critic_kernel,
        out_shape=jax.ShapeDtypeStruct((n_tiles, 1, TB), jnp.float32),
        grid_spec=pltpu.PrefetchScalarGridSpec(
            num_scalar_prefetch=0,
            grid=(n_tiles,),
            in_specs=[
                pl.BlockSpec((TB, INp), lambda i: (i, 0)),   # x tile (pipelined)
                resident((INp, Hp)),                          # w1
                resident((1, Hp)),                            # b1
                resident((Hp, Hp)),                           # w2
                resident((1, Hp)),                            # b2
                resident((8, Hp)),                            # w3 rows
                pl.BlockSpec(memory_space=pltpu.MemorySpace.SMEM),  # b3 scalar
            ],
            out_specs=pl.BlockSpec((1, 1, TB), lambda i: (i, 0, 0)),
        ),
        compiler_params=pltpu.CompilerParams(
            dimension_semantics=("parallel",),
            vmem_limit_bytes=vmem_limit,
        ),
    )(xp, w1p, b1p, w2p, b2p, w3p, b3s)

    # (n_tiles, 1, TB) -> (Bp,) -> (B, 1)
    return out.reshape(Bp)[:B].reshape(B, 1)


def init_critic_params(key, input_shape, critic_dim):
    """PyTorch-style uniform(+/- 1/sqrt(fan_in)) init; weights pre-transposed to
    (in_features, out_features) so forward is y = x @ W + b."""
    ks = jax.random.split(key, 6)

    def lin(kw, kb, fan_in, fan_out):
        bound = 1.0 / jnp.sqrt(jnp.float32(fan_in))
        w = jax.random.uniform(kw, (fan_in, fan_out), jnp.float32, -bound, bound)
        b = jax.random.uniform(kb, (1, fan_out), jnp.float32, -bound, bound)
        return w, b

    w1, b1 = lin(ks[0], ks[1], input_shape, critic_dim)
    w2, b2 = lin(ks[2], ks[3], critic_dim, critic_dim)
    w3, b3 = lin(ks[4], ks[5], critic_dim, 1)
    return w1, b1, w2, b2, w3, b3


if __name__ == "__main__":
    key = jax.random.PRNGKey(0)
    k_x, k_p = jax.random.split(key)

    BATCH = 8          # number of state rows fed to the critic
    INPUT_SHAPE = 32   # critic input feature size
    CRITIC_DIM = 32    # args.critic_dim

    x = jax.random.normal(k_x, (BATCH, INPUT_SHAPE), jnp.float32)
    raw = init_critic_params(k_p, INPUT_SHAPE, CRITIC_DIM)

    # Pad weights ONCE (outside the jitted per-call path).
    padded = prepare_critic_params(*raw)

    q = critic_forward(x, *padded)
    q = jax.block_until_ready(q)

    # Reference check in plain JAX (same math as the PyTorch forward).
    w1, b1, w2, b2, w3, b3 = raw
    h1 = jnp.maximum(x @ w1 + b1, 0.0)
    h2 = jnp.maximum(h1 @ w2 + b2, 0.0)
    q_ref = h2 @ w3 + b3
    assert q.shape == (BATCH, 1)
    assert jnp.allclose(q, q_ref, atol=1e-5, rtol=1e-5)

    print("KERNEL_OK")
</pallas_src>

<mosaic_0001>
module attributes {stable_mosaic.version = 11 : i64} {
  func.func @_critic_kernel(%arg0: i32, %arg1: memref<8x128xf32, #tpu.memory_space<vmem>>, %arg2: memref<128x128xf32, #tpu.memory_space<vmem>>, %arg3: memref<1x128xf32, #tpu.memory_space<vmem>>, %arg4: memref<128x128xf32, #tpu.memory_space<vmem>>, %arg5: memref<1x128xf32, #tpu.memory_space<vmem>>, %arg6: memref<8x128xf32, #tpu.memory_space<vmem>>, %arg7: memref<1x1xf32, #tpu.memory_space<smem>>, %arg8: memref<1x1x8xf32, #tpu.memory_space<vmem>>) attributes {dimension_semantics = [#tpu.dimension_semantics<parallel>], iteration_bounds = array<i64: 1>, scalar_prefetch = 0 : i64, scratch_operands = 0 : i64, tpu.core_type = #tpu.core_type<tc>, window_params = [{transform_indices = @transform_0, window_bounds = array<i64: 8, 128>}, {pipeline_mode = #tpu.pipeline_mode<synchronous>, transform_indices = @transform_1, window_bounds = array<i64: 128, 128>}, {pipeline_mode = #tpu.pipeline_mode<synchronous>, transform_indices = @transform_2, window_bounds = array<i64: 1, 128>}, {pipeline_mode = #tpu.pipeline_mode<synchronous>, transform_indices = @transform_3, window_bounds = array<i64: 128, 128>}, {pipeline_mode = #tpu.pipeline_mode<synchronous>, transform_indices = @transform_4, window_bounds = array<i64: 1, 128>}, {pipeline_mode = #tpu.pipeline_mode<synchronous>, transform_indices = @transform_5, window_bounds = array<i64: 8, 128>}, {transform_indices = @transform_6, window_bounds = array<i64: 1, 1>}, {transform_indices = @transform_7, window_bounds = array<i64: 1, 1, 8>}]} {
    %c0 = arith.constant 0 : index
    %c0_0 = arith.constant 0 : index
    %0 = vector.load %arg1[%c0, %c0_0] : memref<8x128xf32, #tpu.memory_space<vmem>>, vector<8x128xf32>
    %c0_1 = arith.constant 0 : index
    %c0_2 = arith.constant 0 : index
    %1 = vector.load %arg2[%c0_1, %c0_2] : memref<128x128xf32, #tpu.memory_space<vmem>>, vector<128x128xf32>
    %cst = arith.constant dense<0.000000e+00> : vector<8x128xf32>
    %2 = tpu.matmul %0, %1, %cst {dimension_numbers = #tpu.dot_dimension_numbers<[1], [0], [0], [1], [0, 0, 1, 1], [], []>} : vector<8x128xf32>, vector<128x128xf32>, vector<8x128xf32> -> vector<8x128xf32>
    %c0_3 = arith.constant 0 : index
    %c0_4 = arith.constant 0 : index
    %3 = vector.load %arg3[%c0_3, %c0_4] : memref<1x128xf32, #tpu.memory_space<vmem>>, vector<1x128xf32>
    %4 = vector.broadcast %3 : vector<1x128xf32> to vector<8x128xf32>
    %5 = arith.addf %2, %4 : vector<8x128xf32>
    %cst_5 = arith.constant 0.000000e+00 : f32
    %6 = vector.broadcast %cst_5 : f32 to vector<8x128xf32>
    %7 = arith.maximumf %5, %6 : vector<8x128xf32>
    %c0_6 = arith.constant 0 : index
    %c0_7 = arith.constant 0 : index
    %8 = vector.load %arg4[%c0_6, %c0_7] : memref<128x128xf32, #tpu.memory_space<vmem>>, vector<128x128xf32>
    %cst_8 = arith.constant dense<0.000000e+00> : vector<8x128xf32>
    %9 = tpu.matmul %7, %8, %cst_8 {dimension_numbers = #tpu.dot_dimension_numbers<[1], [0], [0], [1], [0, 0, 1, 1], [], []>} : vector<8x128xf32>, vector<128x128xf32>, vector<8x128xf32> -> vector<8x128xf32>
    %c0_9 = arith.constant 0 : index
    %c0_10 = arith.constant 0 : index
    %10 = vector.load %arg5[%c0_9, %c0_10] : memref<1x128xf32, #tpu.memory_space<vmem>>, vector<1x128xf32>
    %11 = vector.broadcast %10 : vector<1x128xf32> to vector<8x128xf32>
    %12 = arith.addf %9, %11 : vector<8x128xf32>
    %cst_11 = arith.constant 0.000000e+00 : f32
    %13 = vector.broadcast %cst_11 : f32 to vector<8x128xf32>
    %14 = arith.maximumf %12, %13 : vector<8x128xf32>
    %c0_12 = arith.constant 0 : index
    %c0_13 = arith.constant 0 : index
    %15 = vector.load %arg6[%c0_12, %c0_13] : memref<8x128xf32, #tpu.memory_space<vmem>>, vector<8x128xf32>
    %cst_14 = arith.constant dense<0.000000e+00> : vector<8x8xf32>
    %16 = tpu.matmul %15, %14, %cst_14 {dimension_numbers = #tpu.dot_dimension_numbers<[1], [1], [0], [0], [0, 0, 1, 0], [], []>} : vector<8x128xf32>, vector<8x128xf32>, vector<8x8xf32> -> vector<8x8xf32>
    %17 = vector.extract_strided_slice %16 {offsets = [0, 0], sizes = [1, 8], strides = [1, 1]} : vector<8x8xf32> to vector<1x8xf32>
    %c0_15 = arith.constant 0 : index
    %c0_16 = arith.constant 0 : index
    %18 = memref.load %arg7[%c0_15, %c0_16] : memref<1x1xf32, #tpu.memory_space<smem>>
    %19 = vector.broadcast %18 : f32 to vector<1x8xf32>
    %20 = arith.addf %17, %19 : vector<1x8xf32>
    %21 = vector.shape_cast %20 : vector<1x8xf32> to vector<1x1x8xf32>
    %c0_17 = arith.constant 0 : index
    %c0_18 = arith.constant 0 : index
    %c0_19 = arith.constant 0 : index
    %22 = vector.load %arg8[%c0_17, %c0_18, %c0_19] : memref<1x1x8xf32, #tpu.memory_space<vmem>>, vector<1x1x8xf32>
    tpu.vector_store %arg8[%c0_17, %c0_18, %c0_19], %21 {strides = array<i32>} : memref<1x1x8xf32, #tpu.memory_space<vmem>>, vector<1x1x8xf32>,
    return
  }
  func.func @transform_0(%arg0: i32) -> (i32, i32) {
    %c0_i32 = arith.constant 0 : i32
    %c0_i32_0 = arith.constant 0 : i32
    return %arg0, %c0_i32 : i32, i32
  }
  func.func @transform_1(%arg0: i32) -> (i32, i32) {
    %c0_i32 = arith.constant 0 : i32
    %c0_i32_0 = arith.constant 0 : i32
    %c0_i32_1 = arith.constant 0 : i32
    return %c0_i32, %c0_i32_0 : i32, i32
  }
  func.func @transform_2(%arg0: i32) -> (i32, i32) {
    %c0_i32 = arith.constant 0 : i32
    %c0_i32_0 = arith.constant 0 : i32
    %c0_i32_1 = arith.constant 0 : i32
    return %c0_i32, %c0_i32_0 : i32, i32
  }
  func.func @transform_3(%arg0: i32) -> (i32, i32) {
    %c0_i32 = arith.constant 0 : i32
    %c0_i32_0 = arith.constant 0 : i32
    %c0_i32_1 = arith.constant 0 : i32
    return %c0_i32, %c0_i32_0 : i32, i32
  }
  func.func @transform_4(%arg0: i32) -> (i32, i32) {
    %c0_i32 = arith.constant 0 : i32
    %c0_i32_0 = arith.constant 0 : i32
    %c0_i32_1 = arith.constant 0 : i32
    return %c0_i32, %c0_i32_0 : i32, i32
  }
  func.func @transform_5(%arg0: i32) -> (i32, i32) {
    %c0_i32 = arith.constant 0 : i32
    %c0_i32_0 = arith.constant 0 : i32
    %c0_i32_1 = arith.constant 0 : i32
    return %c0_i32, %c0_i32_0 : i32, i32
  }
  func.func @transform_6(%arg0: i32) -> (i32, i32) {
    %c0_i32 = arith.constant 0 : i32
    %c0_i32_0 = arith.constant 0 : i32
    %c0_i32_1 = arith.constant 0 : i32
    return %c0_i32, %c0_i32_0 : i32, i32
  }
  func.func @transform_7(%arg0: i32) -> (i32, i32, i32) {
    %c0_i32 = arith.constant 0 : i32
    %c0_i32_0 = arith.constant 0 : i32
    %c0_i32_1 = arith.constant 0 : i32
    return %arg0, %c0_i32, %c0_i32_0 : i32, i32, i32
  }
}

</mosaic_0001>

<llo_original>
// kernel: critic_forward.1
$region0: #{critic_forward.1}
  #allocation0 [shape = 'u32[]', space=smem, size = 0x4, offset = 0x4, fixed_abs, tag = 'smem constant byte address 0x4 - core index']
  #allocation1 [shape = 'u32[72,128]{1,0:T(1,128)}', space=vmem, size = 0x9000, scoped, tag = 'internal scratch']
  #allocation2 [shape = 'f32[1,1]{1,0:T(1,128)S(6)}', space=smem, size = 0x200, scoped, tag = 'scoped memory for critic_forward.1']
  %s0 = inlined_call_operand.vmem [shape: f32[8,128], index: 0, kind: input, shape index: {}]
  %s1 = inlined_call_operand.hbm [shape: f32[128,128], index: 1, kind: input, shape index: {}]
  %s2 = inlined_call_operand.vmem [shape: f32[1,128], index: 2, kind: input, shape index: {}]
  %s3 = inlined_call_operand.hbm [shape: f32[128,128], index: 3, kind: input, shape index: {}]
  %s4 = inlined_call_operand.vmem [shape: f32[1,128], index: 4, kind: input, shape index: {}]
  %s5 = inlined_call_operand.vmem [shape: f32[8,128], index: 5, kind: input, shape index: {}]
  %s6 = inlined_call_operand.<no memory space> [shape: f32[1,1], index: 6, kind: input, shape index: {}]
  %s7 = inlined_call_operand.hbm [shape: f32[1,1,8], index: 7, kind: output, shape index: {}]
  %s8 = sld [smem:[#allocation0]]
  $region46: #{critic_forward.1} parent=0
    _
  %s10 = ssub.s32 1, %s8
  %s11 = scalar_select 0, %s10, %s8
  %12 = sst [smem:[#allocation2]] %s6
  $region1: #{critic_forward.1} parent=0
    #allocation3 [shape = 'u8[65536]{0}', space=vmem, size = 0x10000, scoped, tag = 'input window, operand 1, single buffered']
    #allocation4 [shape = 's32[1]{0}', space=sflag, size = 0x4, scoped, tag = 'scoped memory for critic_forward.1']
    #allocation5 [shape = 's32[1]{0}', space=sflag, size = 0x4, scoped, tag = 'scoped memory for critic_forward.1']
    #allocation6 [shape = 'u8[65536]{0}', space=vmem, size = 0x10000, scoped, tag = 'input window, operand 3, single buffered']
    #allocation7 [shape = 's32[1]{0}', space=sflag, size = 0x4, scoped, tag = 'scoped memory for critic_forward.1']
    #allocation8 [shape = 'u8[512]{0}', space=vmem, size = 0x400, scoped, tag = 'output window, operand 0, single buffered']
    %13 = vsyncpa [#allocation4], 0
    %14 = vsyncpa [#allocation7], 0
    %15 = vsyncpa [#allocation5], 0
    // Predicated region
    $region2: #{critic_forward.1} parent=1 // pred_check
      _
    $region3: #{critic_forward.1} parent=1 // pred_check_branch
      %17 = sbr.rel (0) target = $region5
    $region4: #{critic_forward.1} parent=1 // pred_region
      _
    $region5: #{critic_forward.1} parent=1 // pred_fallthru
      _
    // Predicated region
    $region6: #{critic_forward.1} parent=1 // pred_check
      _
    $region7: #{critic_forward.1} parent=1 // pred_check_branch
      %19 = sbr.rel (0) target = $region9
    $region8: #{critic_forward.1} parent=1 // pred_region
      %21 = vsyncadd [#allocation4], 0
      %s22 = sshll.u32 %s1, 4
      %s23 = int_to_ptr.hbm [resolvable:$true] %s22
      %s24 = sshll.u32 [#allocation3], 4
      %s25 = int_to_ptr.vmem [resolvable:$true] %s24
      %30 = dma.hbm_to_vmem [thread:$0]  %s23, 2048, %s25, [#allocation4], 128, 128, 8
    $region9: #{critic_forward.1} parent=1 // pred_fallthru
      _
    // Predicated region
    $region10: #{critic_forward.1} parent=1 // pred_check
      _
    $region11: #{critic_forward.1} parent=1 // pred_check_branch
      %32 = sbr.rel (0) target = $region13
    $region12: #{critic_forward.1} parent=1 // pred_region
      _
    $region13: #{critic_forward.1} parent=1 // pred_fallthru
      _
    // Predicated region
    $region14: #{critic_forward.1} parent=1 // pred_check
      _
    $region15: #{critic_forward.1} parent=1 // pred_check_branch
      %34 = sbr.rel (0) target = $region17
    $region16: #{critic_forward.1} parent=1 // pred_region
      %36 = vsyncadd [#allocation7], 0
      %s37 = sshll.u32 %s3, 4
      %s38 = int_to_ptr.hbm [resolvable:$true] %s37
      %s39 = sshll.u32 [#allocation6], 4
      %s40 = int_to_ptr.vmem [resolvable:$true] %s39
      %45 = dma.hbm_to_vmem [thread:$0]  %s38, 2048, %s40, [#allocation7], 128, 128, 8
    $region17: #{critic_forward.1} parent=1 // pred_fallthru
      _
    // Predicated region
    $region18: #{critic_forward.1} parent=1 // pred_check
      _
    $region19: #{critic_forward.1} parent=1 // pred_check_branch
      %47 = sbr.rel (0) target = $region21
    $region20: #{critic_forward.1} parent=1 // pred_region
      _
    $region21: #{critic_forward.1} parent=1 // pred_fallthru
      _
    // Predicated region
    $region22: #{critic_forward.1} parent=1 // pred_check
      _
    $region23: #{critic_forward.1} parent=1 // pred_check_branch
      %49 = sbr.rel (0) target = $region25
    $region24: #{critic_forward.1} parent=1 // pred_region
      _
    $region25: #{critic_forward.1} parent=1 // pred_fallthru
      _
    // Predicated region
    $region26: #{critic_forward.1} parent=1 // pred_check
      _
    $region27: #{critic_forward.1} parent=1 // pred_check_branch
      %51 = sbr.rel (0) target = $region29
    $region28: #{critic_forward.1} parent=1 // pred_region
      _
    $region29: #{critic_forward.1} parent=1 // pred_fallthru
      _
    // Predicated region
    $region30: #{critic_forward.1} parent=1 // pred_check
      _
    $region31: #{critic_forward.1} parent=1 // pred_check_branch
      %53 = sbr.rel (0) target = $region33
    $region32: #{critic_forward.1} parent=1 // pred_region
      %55 = dma.done [#allocation4], 2048
    $region33: #{critic_forward.1} parent=1 // pred_fallthru
      _
    // Predicated region
    $region34: #{critic_forward.1} parent=1 // pred_check
      _
    $region35: #{critic_forward.1} parent=1 // pred_check_branch
      %57 = sbr.rel (0) target = $region37
    $region36: #{critic_forward.1} parent=1 // pred_region
      %59 = dma.done [#allocation7], 2048
    $region37: #{critic_forward.1} parent=1 // pred_fallthru
      _
    %v60 = vld [vmem:[%s0] sm:$0xff]
    %v61 = vld [vmem:[#allocation3] sm:$0xff]
    %v62 = vld [vmem:[#allocation3 + $0x8] sm:$0xff]
    %v63 = vld [vmem:[#allocation3 + $0x10] sm:$0xff]
    %v64 = vld [vmem:[#allocation3 + $0x18] sm:$0xff]
    %v65 = vld [vmem:[#allocation3 + $0x20] sm:$0xff]
    %v66 = vld [vmem:[#allocation3 + $0x28] sm:$0xff]
    %v67 = vld [vmem:[#allocation3 + $0x30] sm:$0xff]
    %v68 = vld [vmem:[#allocation3 + $0x38] sm:$0xff]
    %v69 = vld [vmem:[#allocation3 + $0x40] sm:$0xff]
    %v70 = vld [vmem:[#allocation3 + $0x48] sm:$0xff]
    %v71 = vld [vmem:[#allocation3 + $0x50] sm:$0xff]
    %v72 = vld [vmem:[#allocation3 + $0x58] sm:$0xff]
    %v73 = vld [vmem:[#allocation3 + $0x60] sm:$0xff]
    %v74 = vld [vmem:[#allocation3 + $0x68] sm:$0xff]
    %v75 = vld [vmem:[#allocation3 + $0x70] sm:$0xff]
    %v76 = vld [vmem:[#allocation3 + $0x78] sm:$0xff]
    %v77 = vld [vmem:[%s2] sm:$0x1]
    %v79 = vperm.slane %v77, 0
    %81 = vmatpush.msra.mxu0 %v76
    %82 = vmatpush.msra.mxu0 %v75
    %83 = vmatpush.msra.mxu0 %v74
    %84 = vmatpush.msra.mxu0 %v73
    %85 = vmatpush.msra.mxu0 %v72
    %86 = vmatpush.msra.mxu0 %v71
    %87 = vmatpush.msra.mxu0 %v70
    %88 = vmatpush.msra.mxu0 %v69
    %89 = vmatpush.msra.mxu0 %v68
    %90 = vmatpush.msra.mxu0 %v67
    %91 = vmatpush.msra.mxu0 %v66
    %92 = vmatpush.msra.mxu0 %v65
    %93 = vmatpush.msra.mxu0 %v64
    %94 = vmatpush.msra.mxu0 %v63
    %95 = vmatpush.msra.mxu0 %v62
    %96 = vmatpush.msra.mxu0 %v61
    %97 = vmatmul.f32.gmra.mxu0 %v60
    %v98 = vpop.f32.mrf.mxu0
    %v99 = vadd.f32 %v79, %v98
    %100 = vdwg.mxu0
    %v101 = vmax.f32 %v99, 0.0
    %v102 = vld [vmem:[#allocation6] sm:$0xff]
    %v103 = vld [vmem:[#allocation6 + $0x8] sm:$0xff]
    %v104 = vld [vmem:[#allocation6 + $0x10] sm:$0xff]
    %v105 = vld [vmem:[#allocation6 + $0x18] sm:$0xff]
    %v106 = vld [vmem:[#allocation6 + $0x20] sm:$0xff]
    %v107 = vld [vmem:[#allocation6 + $0x28] sm:$0xff]
    %v108 = vld [vmem:[#allocation6 + $0x30] sm:$0xff]
    %v109 = vld [vmem:[#allocation6 + $0x38] sm:$0xff]
    %v110 = vld [vmem:[#allocation6 + $0x40] sm:$0xff]
    %v111 = vld [vmem:[#allocation6 + $0x48] sm:$0xff]
    %v112 = vld [vmem:[#allocation6 + $0x50] sm:$0xff]
    %v113 = vld [vmem:[#allocation6 + $0x58] sm:$0xff]
    %v114 = vld [vmem:[#allocation6 + $0x60] sm:$0xff]
    %v115 = vld [vmem:[#allocation6 + $0x68] sm:$0xff]
    %v116 = vld [vmem:[#allocation6 + $0x70] sm:$0xff]
    %v117 = vld [vmem:[#allocation6 + $0x78] sm:$0xff]
    %v118 = vld [vmem:[%s4] sm:$0x1]
    %v120 = vperm.slane %v118, 0
    %122 = vmatpush.msra.mxu0 %v117
    %123 = vmatpush.msra.mxu0 %v116
    %124 = vmatpush.msra.mxu0 %v115
    %125 = vmatpush.msra.mxu0 %v114
    %126 = vmatpush.msra.mxu0 %v113
    %127 = vmatpush.msra.mxu0 %v112
    %128 = vmatpush.msra.mxu0 %v111
    %129 = vmatpush.msra.mxu0 %v110
    %130 = vmatpush.msra.mxu0 %v109
    %131 = vmatpush.msra.mxu0 %v108
    %132 = vmatpush.msra.mxu0 %v107
    %133 = vmatpush.msra.mxu0 %v106
    %134 = vmatpush.msra.mxu0 %v105
    %135 = vmatpush.msra.mxu0 %v104
    %136 = vmatpush.msra.mxu0 %v103
    %137 = vmatpush.msra.mxu0 %v102
    %138 = vmatmul.f32.gmra.mxu0 %v101
    %v139 = vpop.f32.mrf.mxu0
    %v140 = vadd.f32 %v120, %v139
    %141 = vdwg.mxu0
    %v142 = vmax.f32 %v140, 0.0
    %v143 = vld [vmem:[%s5] sm:$0xff]
    %144 = vmatpush.xpose.msra.mxu0 0.0
    %145 = vmatpush.xpose.msra.mxu0 0.0
    %146 = vmatpush.xpose.msra.mxu0 0.0
    %147 = vmatpush.xpose.msra.mxu0 0.0
    %148 = vmatpush.xpose.msra.mxu0 0.0
    %149 = vmatpush.xpose.msra.mxu0 0.0
    %150 = vmatpush.xpose.msra.mxu0 0.0
    %151 = vmatpush.xpose.msra.mxu0 0.0
    %152 = vmatpush.xpose.msra.mxu0 0.0
    %153 = vmatpush.xpose.msra.mxu0 0.0
    %154 = vmatpush.xpose.msra.mxu0 0.0
    %155 = vmatpush.xpose.msra.mxu0 0.0
    %156 = vmatpush.xpose.msra.mxu0 0.0
    %157 = vmatpush.xpose.msra.mxu0 0.0
    %158 = vmatpush.xpose.msra.mxu0 0.0
    %159 = vmatpush.xpose.msra.mxu0 %v142
    %160 = vmatmul.f32.gmra.mxu0 %v143
    %v161 = vpop.f32.mrf.mxu0
    %v162 = vadd.f32 0.0, %v161
    %163 = vdwg.mxu0
    %s164 = sld [smem:[#allocation2]]
    %v165 = vstv %s164
    %v166 = vadd.f32 %v162, %v165
    %vm167 = vcmask 57344
    %168 = vst.msk [vmem:[#allocation8] sm:$0x1] %vm167, %v166
    // Predicated region
    $region38: #{critic_forward.1} parent=1 // pred_check
      _
    $region39: #{critic_forward.1} parent=1 // pred_check_branch
      %170 = sbr.rel (0) target = $region41
    $region40: #{critic_forward.1} parent=1 // pred_region
      %172 = vsyncadd [#allocation5], 0
      %s174 = sshll.u32 [#allocation8], 4
      %s175 = int_to_ptr.vmem [resolvable:$true] %s174
      %s176 = sshll.u32 %s7, 4
      %s177 = int_to_ptr.hbm [resolvable:$true] %s176
      %179 = dma.vmem_to_hbm [thread:$0]  %s175, 16, %s177, [#allocation5]
    $region41: #{critic_forward.1} parent=1 // pred_fallthru
      _
    // Predicated region
    $region42: #{critic_forward.1} parent=1 // pred_check
      _
    $region43: #{critic_forward.1} parent=1 // pred_check_branch
      %181 = sbr.rel (0) target = $region45
    $region44: #{critic_forward.1} parent=1 // pred_region
      %183 = dma.done [#allocation5], 16
    $region45: #{critic_forward.1} parent=1 // pred_fallthru
      _
    %184 = vsyncpa [#allocation4], 1
    %185 = vsyncpa [#allocation7], 1
    %186 = vsyncpa [#allocation5], 1

</llo_original>
